<compile_context>
chip_gen: v7x
topology: tpu7x:2x2x1
jax: 0.10.0
libtpu: 0.0.40
codegen_flags: <defaults>
</compile_context>

<pallas_src>
import jax
import jax.numpy as jnp
from jax.experimental import pallas as pl
from jax.experimental.pallas import tpu as pltpu

_LANES = 128
_SMALL_BYTES = 1 << 20            # below this: single block, nothing to pipeline
_TARGET_BLOCK_BYTES = 4 << 20     # ~4 MiB blocks amortize ~0.35us/step on v7x


def _ztransform_kernel(mu_ref, inv_sigma_ref, x_ref, o_ref):
    # mu / inv_sigma are shape-(1,) f32 scalars in SMEM.
    mu = mu_ref[0]
    inv_sigma = inv_sigma_ref[0]
    x = x_ref[...].astype(jnp.float32)
    # Multiply by the hoisted reciprocal (scalar 1/sigma computed once in the
    # wrapper); may differ from the PyTorch divide by <=1 ulp per element.
    o_ref[...] = ((x - mu) * inv_sigma).astype(o_ref.dtype)


def _choose_width(n):
    """Widest lane-dense slab width that divides n and keeps >=8 sublanes."""
    for cand in (8192, 4096, 2048, 1024, 512, 256, 128):
        if n % cand == 0 and n // cand >= 8:
            return cand
    return _LANES  # tiny arrays: block dims == array dims is always legal


def _choose_tm(rows, width, in_itemsize, out_itemsize):
    """Rows per block: divisor of rows, >=2 grid steps for big arrays."""
    packing = max(1, 4 // min(in_itemsize, out_itemsize))
    sub = 8 * packing                                  # sublane granularity
    bytes_per_row = width * max(in_itemsize, out_itemsize)
    total_bytes = rows * bytes_per_row

    if total_bytes <= _SMALL_BYTES or rows < 2 * sub:
        return rows                                    # single full block

    target_rows = max(sub, _TARGET_BLOCK_BYTES // bytes_per_row)
    best = None
    tm = sub
    while tm <= rows // 2:
        if rows % tm == 0:
            grid = rows // tm
            # (a) closest to the byte target, (b) even grid (v7x megacore).
            key = (abs(tm - target_rows), grid % 2, tm)
            if best is None or key < best[0]:
                best = (key, tm)
        tm += sub
    if best is not None:
        return best[1]
    # No exact divisor that is a multiple of the packing: fall back to a
    # round-down (last block relies on Pallas boundary masking -- still valid).
    return max(sub, min(rows, (target_rows // sub) * sub))


def _ztransform_2d(x2d, mu_arr, inv_arr, out_dtype, tm, width):
    rows = x2d.shape[0]
    n = rows * width
    out_itemsize = jnp.dtype(out_dtype).itemsize
    return pl.pallas_call(
        _ztransform_kernel,
        out_shape=jax.ShapeDtypeStruct((rows, width), out_dtype),
        grid=(pl.cdiv(rows, tm),),
        in_specs=[
            pl.BlockSpec(memory_space=pltpu.SMEM),        # mu
            pl.BlockSpec(memory_space=pltpu.SMEM),        # 1/sigma
            pl.BlockSpec((tm, width), lambda i: (i, 0)),  # x tile
        ],
        out_specs=pl.BlockSpec((tm, width), lambda i: (i, 0)),
        compiler_params=pltpu.CompilerParams(
            dimension_semantics=("parallel",),            # v7x: shard over 2 TCs
            vmem_limit_bytes=48 * 1024 * 1024,
        ),
        cost_estimate=pl.CostEstimate(
            flops=2 * n,
            transcendentals=0,
            bytes_accessed=n * (x2d.dtype.itemsize + out_itemsize),
        ),
    )(mu_arr, inv_arr, x2d)


def ztransform_forward(x, mu, sigma):
    """Pallas implementation of ZTransform.forward: (x - mu) / sigma."""
    x = jnp.asarray(x)
    orig_shape = x.shape
    # PyTorch promotes against the f32 scalars mu/sigma.
    out_dtype = jnp.promote_types(x.dtype, jnp.float32)

    mu_f = jnp.asarray(mu, dtype=jnp.float32)
    sigma_f = jnp.asarray(sigma, dtype=jnp.float32)
    inv_sigma_f = 1.0 / sigma_f                   # hoisted scalar reciprocal
    mu_arr = mu_f.reshape(1)
    inv_arr = inv_sigma_f.reshape(1)

    flat = x.reshape(-1)                          # contiguous -> free reshape
    n = flat.shape[0]
    n_main = n - (n % _LANES)

    pieces = []
    if n_main:
        width = _choose_width(n_main)
        rows = n_main // width
        tm = _choose_tm(rows, width, flat.dtype.itemsize,
                        jnp.dtype(out_dtype).itemsize)
        x2d = flat[:n_main].reshape(rows, width)
        out2d = _ztransform_2d(x2d, mu_arr, inv_arr, out_dtype, tm, width)
        pieces.append(out2d.reshape(-1))
    if n_main < n:
        # <128-element tail handled in plain XLA -- avoids the old
        # jnp.pad + post-slice round-trip of the whole tensor through HBM.
        tail = flat[n_main:].astype(jnp.float32)
        pieces.append(((tail - mu_f) * inv_sigma_f).astype(out_dtype))

    out = pieces[0] if len(pieces) == 1 else jnp.concatenate(pieces)
    return out.reshape(orig_shape)


class ZTransform:
    """JAX/Pallas port of the PyTorch ZTransform module."""

    def __init__(self, data):
        data = jnp.asarray(data, dtype=jnp.float32)
        # torch.nanmean(data)
        self.mu = jnp.nanmean(data)
        # torch.std(torch.nan_to_num(data, 0, 0, 0)) -> unbiased std (ddof=1)
        clean = jnp.nan_to_num(data, nan=0.0, posinf=0.0, neginf=0.0)
        self.sigma = jnp.std(clean, ddof=1)
        # TODO(synk): .to(device/dtype) is host-side plumbing; not needed in JAX.

    def __call__(self, x):
        return ztransform_forward(x, self.mu, self.sigma)


if __name__ == "__main__":
    key = jax.random.PRNGKey(0)
    k_data, k_x, k_big, k_y = jax.random.split(key, 4)

    # Fitting data for the transform (contains NaNs to exercise nanmean).
    data = jax.random.normal(k_data, (64, 16), dtype=jnp.float32) * 3.0 + 5.0
    data = data.at[0, 0].set(jnp.nan)
    data = data.at[3, 7].set(jnp.nan)

    zt = ZTransform(data)
    mu, sigma = zt.mu, zt.sigma

    # 1) Primary small input, NCHW layout (lane-aligned single-block path).
    x = jax.random.normal(k_x, (2, 4, 16, 16), dtype=jnp.float32) * 3.0 + 5.0
    out = jax.block_until_ready(zt(x))
    ref = (x - mu) / sigma
    assert out.shape == x.shape and out.dtype == jnp.float32
    assert jnp.allclose(out, ref, rtol=1e-5, atol=1e-5)

    # 2) ~2 MiB input (exercises the multi-step pipelined grid, even grid).
    xb = jax.random.normal(k_big, (8, 4, 128, 128), dtype=jnp.float32) * 2.0 - 1.0
    out_b = jax.block_until_ready(zt(xb))
    ref_b = (xb - mu) / sigma
    assert out_b.shape == xb.shape and out_b.dtype == jnp.float32
    assert jnp.allclose(out_b, ref_b, rtol=1e-5, atol=1e-5)

    # 3) Ragged-length input (lane-aligned prefix via kernel + XLA tail).
    y = jax.random.normal(k_y, (5, 7, 9), dtype=jnp.float32) * 2.0 + 1.0
    out_y = jax.block_until_ready(zt(y))
    ref_y = (y - mu) / sigma
    assert out_y.shape == y.shape and out_y.dtype == jnp.float32
    assert jnp.allclose(out_y, ref_y, rtol=1e-5, atol=1e-5)

    print("KERNEL_OK")
</pallas_src>

<mosaic_0001>
module attributes {stable_mosaic.version = 11 : i64} {
  func.func @_ztransform_kernel(%arg0: i32, %arg1: memref<1xf32, #tpu.memory_space<smem>>, %arg2: memref<1xf32, #tpu.memory_space<smem>>, %arg3: memref<8x256xf32, #tpu.memory_space<vmem>>, %arg4: memref<8x256xf32, #tpu.memory_space<vmem>>) attributes {dimension_semantics = [#tpu.dimension_semantics<parallel>], iteration_bounds = array<i64: 1>, scalar_prefetch = 0 : i64, scratch_operands = 0 : i64, tpu.core_type = #tpu.core_type<tc>, window_params = [{transform_indices = @transform_0, window_bounds = array<i64: 1>}, {transform_indices = @transform_1, window_bounds = array<i64: 1>}, {transform_indices = @transform_2, window_bounds = array<i64: 8, 256>}, {transform_indices = @transform_3, window_bounds = array<i64: 8, 256>}]} {
    %c0 = arith.constant 0 : index
    %0 = memref.load %arg1[%c0] : memref<1xf32, #tpu.memory_space<smem>>
    %c0_0 = arith.constant 0 : index
    %1 = memref.load %arg2[%c0_0] : memref<1xf32, #tpu.memory_space<smem>>
    %c0_1 = arith.constant 0 : index
    %c0_2 = arith.constant 0 : index
    %2 = vector.load %arg3[%c0_1, %c0_2] : memref<8x256xf32, #tpu.memory_space<vmem>>, vector<8x256xf32>
    %3 = vector.broadcast %0 : f32 to vector<8x256xf32>
    %4 = arith.subf %2, %3 : vector<8x256xf32>
    %5 = vector.broadcast %1 : f32 to vector<8x256xf32>
    %6 = arith.mulf %4, %5 : vector<8x256xf32>
    %c0_3 = arith.constant 0 : index
    %c0_4 = arith.constant 0 : index
    %7 = vector.load %arg4[%c0_3, %c0_4] : memref<8x256xf32, #tpu.memory_space<vmem>>, vector<8x256xf32>
    tpu.vector_store %arg4[%c0_3, %c0_4], %6 {strides = array<i32>} : memref<8x256xf32, #tpu.memory_space<vmem>>, vector<8x256xf32>,
    return
  }
  func.func @transform_0(%arg0: i32) -> i32 {
    %c0_i32 = arith.constant 0 : i32
    %c0_i32_0 = arith.constant 0 : i32
    return %c0_i32 : i32
  }
  func.func @transform_1(%arg0: i32) -> i32 {
    %c0_i32 = arith.constant 0 : i32
    %c0_i32_0 = arith.constant 0 : i32
    return %c0_i32 : i32
  }
  func.func @transform_2(%arg0: i32) -> (i32, i32) {
    %c0_i32 = arith.constant 0 : i32
    %c0_i32_0 = arith.constant 0 : i32
    return %arg0, %c0_i32 : i32, i32
  }
  func.func @transform_3(%arg0: i32) -> (i32, i32) {
    %c0_i32 = arith.constant 0 : i32
    %c0_i32_0 = arith.constant 0 : i32
    return %arg0, %c0_i32 : i32, i32
  }
}

</mosaic_0001>

<llo_original>
// kernel: tpu_custom_call.1
$region0: #{tpu_custom_call.1}
  #allocation0 [shape = 'u32[]', space=smem, size = 0x4, offset = 0x4, fixed_abs, tag = 'smem constant byte address 0x4 - core index']
  #allocation1 [shape = 'u32[144,128]{1,0:T(1,128)}', space=vmem, size = 0x12000, scoped, tag = 'internal scratch']
  #allocation2 [shape = 'f32[1]{0:T(128)S(6)}', space=smem, size = 0x200, scoped, tag = 'scoped memory for tpu_custom_call.1']
  #allocation3 [shape = 'f32[1]{0:T(128)S(6)}', space=smem, size = 0x200, scoped, tag = 'scoped memory for tpu_custom_call.1']
  %s0 = inlined_call_operand.<no memory space> [shape: f32[1], index: 0, kind: input, shape index: {}]
  %s1 = inlined_call_operand.<no memory space> [shape: f32[1], index: 1, kind: input, shape index: {}]
  %s2 = inlined_call_operand.hbm [shape: f32[8,256], index: 2, kind: input, shape index: {}]
  %s3 = inlined_call_operand.hbm [shape: f32[8,256], index: 3, kind: output, shape index: {}]
  %s4 = sld [smem:[#allocation0]]
  $region26: #{tpu_custom_call.1} parent=0
    _
  %s6 = ssub.s32 1, %s4
  %s7 = scalar_select 0, %s6, %s4
  %8 = sst [smem:[#allocation2]] %s0
  %9 = sst [smem:[#allocation3]] %s1
  $region1: #{tpu_custom_call.1} parent=0
    #allocation4 [shape = 'u8[8192]{0}', space=vmem, size = 0x2000, scoped, tag = 'input window, operand 2, single buffered']
    #allocation5 [shape = 's32[1]{0}', space=sflag, size = 0x4, scoped, tag = 'scoped memory for tpu_custom_call.1']
    #allocation6 [shape = 's32[1]{0}', space=sflag, size = 0x4, scoped, tag = 'scoped memory for tpu_custom_call.1']
    #allocation7 [shape = 'u8[8192]{0}', space=vmem, size = 0x2000, scoped, tag = 'output window, operand 0, single buffered']
    %10 = vsyncpa [#allocation5], 0
    %11 = vsyncpa [#allocation6], 0
    // Predicated region
    $region2: #{tpu_custom_call.1} parent=1 // pred_check
      _
    $region3: #{tpu_custom_call.1} parent=1 // pred_check_branch
      %13 = sbr.rel (0) target = $region5
    $region4: #{tpu_custom_call.1} parent=1 // pred_region
      _
    $region5: #{tpu_custom_call.1} parent=1 // pred_fallthru
      _
    // Predicated region
    $region6: #{tpu_custom_call.1} parent=1 // pred_check
      _
    $region7: #{tpu_custom_call.1} parent=1 // pred_check_branch
      %15 = sbr.rel (0) target = $region9
    $region8: #{tpu_custom_call.1} parent=1 // pred_region
      _
    $region9: #{tpu_custom_call.1} parent=1 // pred_fallthru
      _
    // Predicated region
    $region10: #{tpu_custom_call.1} parent=1 // pred_check
      _
    $region11: #{tpu_custom_call.1} parent=1 // pred_check_branch
      %17 = sbr.rel (0) target = $region13
    $region12: #{tpu_custom_call.1} parent=1 // pred_region
      %s19 = ssub.s32 256, 256
      %20 = vsyncadd [#allocation5], %s19
      %s22 = sshll.u32 [#allocation4], 4
      %s23 = int_to_ptr.vmem [resolvable:$true] %s22
      %25 = dma.hbm_to_vmem [thread:$0]  %s2, 256, %s23, [#allocation5]
    $region13: #{tpu_custom_call.1} parent=1 // pred_fallthru
      _
    // Predicated region
    $region14: #{tpu_custom_call.1} parent=1 // pred_check
      _
    $region15: #{tpu_custom_call.1} parent=1 // pred_check_branch
      %27 = sbr.rel (0) target = $region17
    $region16: #{tpu_custom_call.1} parent=1 // pred_region
      %28 = dma.done [#allocation5], 256
    $region17: #{tpu_custom_call.1} parent=1 // pred_fallthru
      _
    %s29 = sld [smem:[#allocation2]]
    %s30 = sld [smem:[#allocation3]]
    %v31 = vld [vmem:[#allocation4] sm:$0xff]
    %v32 = vld [vmem:[#allocation4 + $0x8] sm:$0xff]
    %v33 = vstv %s29
    %v34 = vsub.f32 %v31, %v33
    %v35 = vsub.f32 %v32, %v33
    %v36 = vstv %s30
    %v37 = vmul.f32 %v34, %v36
    %v38 = vmul.f32 %v35, %v36
    %39 = vst [vmem:[#allocation7] sm:$0xff] %v37
    %40 = vst [vmem:[#allocation7 + $0x8] sm:$0xff] %v38
    // Predicated region
    $region18: #{tpu_custom_call.1} parent=1 // pred_check
      _
    $region19: #{tpu_custom_call.1} parent=1 // pred_check_branch
      %42 = sbr.rel (0) target = $region21
    $region20: #{tpu_custom_call.1} parent=1 // pred_region
      %s44 = ssub.s32 256, 256
      %45 = vsyncadd [#allocation6], %s44
      %s47 = sshll.u32 [#allocation7], 4
      %s48 = int_to_ptr.vmem [resolvable:$true] %s47
      %50 = dma.vmem_to_hbm [thread:$0]  %s48, 256, %s3, [#allocation6]
    $region21: #{tpu_custom_call.1} parent=1 // pred_fallthru
      _
    // Predicated region
    $region22: #{tpu_custom_call.1} parent=1 // pred_check
      _
    $region23: #{tpu_custom_call.1} parent=1 // pred_check_branch
      %52 = sbr.rel (0) target = $region25
    $region24: #{tpu_custom_call.1} parent=1 // pred_region
      %53 = dma.done [#allocation6], 256
    $region25: #{tpu_custom_call.1} parent=1 // pred_fallthru
      _
    %54 = vsyncpa [#allocation5], 1
    %55 = vsyncpa [#allocation6], 1

</llo_original>
